<compile_context>
chip_gen: v6e
topology: v6e:2x2x1
jax: 0.10.0
libtpu: 0.0.40
codegen_flags: <defaults>
</compile_context>

<pallas_src>
import functools

import jax
import jax.numpy as jnp
import numpy as np
from jax.experimental import pallas as pl
from jax.experimental.pallas import tpu as pltpu

# ----------------------------- configuration -------------------------------
IN_CHANNELS = 4
OUT_CHANNELS = 2
LOCALITY_SIZE = 2                      # -> kernel K = 2*2+1 = 5
K = 2 * LOCALITY_SIZE + 1
SUPPORT_FACTOR = 1.3
SQUARE_FACTOR = (1.2,)                 # module indexes square_factor[ts]; ts = 0
TS = 0
MAX_SUPPORT = SUPPORT_FACTOR * K
N_ALTERNATIVE_CELLS = 1                # only the n_alternative_cells <= 1 path

B, H, W = 2, 16, 16
CKK = IN_CHANNELS * K * K
HW = H * W


# ------------------------------ parameter init ------------------------------
def init_lateral_weights(in_ch, out_ch, k, ls):
    """Replicates LateralLayer._init_lateral_weights (n_alternative_cells<=1)."""
    in_feat = in_ch - out_ch
    w = np.zeros((out_ch, in_ch * k * k), np.float32)
    for co in range(out_ch):
        for ci in range(in_ch):
            if ci == co or ci + in_feat == co:
                cii = ci * k * k + ls * k + ls
                w[co, cii] = 1.0
    return jnp.asarray(w)


# ----------------------- im2col (= fixed rearrange conv) --------------------
def im2col_same(x, k):
    """x: (B, C, H, W) -> (B, C*k*k, H*W); channel order ci*k*k + j*k + kk."""
    b, c, h, w = x.shape
    pad = (k - 1) // 2
    xp = jnp.pad(x, ((0, 0), (0, 0), (pad, pad), (pad, pad)))
    cols = []
    for j in range(k):
        for kk in range(k):
            cols.append(xp[:, :, j:j + h, kk:kk + w])
    xr = jnp.stack(cols, axis=2)               # (B, C, k*k, H, W)
    return xr.reshape(b, c * k * k, h * w)


# -------------------------------- Pallas kernel ------------------------------
def lateral_kernel(w_ref, x_ref, u_ref, out_ref, *,
                   square_factor, max_support, batch, hw):
    # x arrives pre-binarized as bf16 {0,1}; cast to f32 (exact) for the dot.
    x_bin = x_ref[...].astype(jnp.float32)                         # (CKK, B*HW)

    # 1x1 conv == matmul; batch folded into the lane (N) dimension.
    x_lat = jnp.dot(w_ref[...], x_bin,
                    preferred_element_type=jnp.float32)            # (out_ch, B*HW)

    # max-support fold
    x_fold = jnp.where(x_lat < max_support,
                       x_lat,
                       max_support - 0.5 * (x_lat - max_support))

    # per-(batch, channel) spatial-max normalization.  Batch b lives in the
    # static lane segment [b*hw, (b+1)*hw) — static slices, no relayout.
    segs = []
    for bi in range(batch):
        s = x_fold[:, bi * hw:(bi + 1) * hw]
        segs.append(s / (1e-10 + jnp.max(s, axis=-1, keepdims=True)))
    x_norm = jnp.clip(jnp.concatenate(segs, axis=-1), 0.0, 1.0)

    # 'bernoulli' activation: p = clip(x_norm ** sf, 0, 1); sample via uniforms.
    p = jnp.clip(x_norm ** square_factor, 0.0, 1.0)
    x_b = jnp.where(u_ref[...] < p, 1.0, 0.0)

    # single merged, lane-dense output block: [lat ; norm ; bin] along sublanes
    out_ref[...] = jnp.concatenate([x_lat, x_norm, x_b], axis=0)


def lateral_pallas_call(w_lateral, x_col2d, u, *, batch, hw):
    out_ch, ckk = w_lateral.shape
    n = batch * hw
    kernel = functools.partial(lateral_kernel,
                               square_factor=float(SQUARE_FACTOR[TS]),
                               max_support=float(MAX_SUPPORT),
                               batch=batch, hw=hw)
    return pl.pallas_call(
        kernel,
        out_shape=jax.ShapeDtypeStruct((3 * out_ch, n), jnp.float32),
        grid=(1,),
        in_specs=[
            pl.BlockSpec((out_ch, ckk), lambda i: (0, 0)),     # W_lateral (f32)
            pl.BlockSpec((ckk, n), lambda i: (0, 0)),          # im2col, bf16 {0,1}
            pl.BlockSpec((out_ch, n), lambda i: (0, 0)),       # uniform randoms
        ],
        out_specs=pl.BlockSpec((3 * out_ch, n), lambda i: (0, 0)),
        compiler_params=pltpu.CompilerParams(dimension_semantics=("arbitrary",)),
    )(w_lateral, x_col2d, u)


# --------------------------------- wrapper ----------------------------------
def lateral_forward(x, w_lateral, key):
    """x: (B, Cin, H, W) NCHW.  Returns (x_lateral_norm, x_lateral_bin, stats)."""
    b, _, h, w = x.shape
    hw = h * w
    out_ch = w_lateral.shape[0]

    # Binarize before the (pure data-movement) rearrange conv — equivalent to
    # binarizing x_rearranged — and ship bf16 to halve input DMA bytes.
    x_b01 = (x > 0.5).astype(jnp.bfloat16)
    x_col = im2col_same(x_b01, K)                               # (B, CKK, HW)
    ckk = x_col.shape[1]
    x_col2d = jnp.transpose(x_col, (1, 0, 2)).reshape(ckk, b * hw)   # (CKK, B*HW)

    # uniforms for the Bernoulli activation (one per output element)
    u = jax.random.uniform(key, (out_ch, b * hw), jnp.float32)

    out = lateral_pallas_call(w_lateral, x_col2d, u, batch=b, hw=hw)  # (3*oc, B*HW)
    out = out.reshape(3, out_ch, b, h, w).transpose(0, 2, 1, 3, 4)    # (3,B,oc,H,W)
    x_lat, x_norm, x_bin = out[0], out[1], out[2]

    # stats (glue, plain JAX) — guarded against empty / singleton masks
    act = x_bin > 0
    inact = ~act

    def masked_stats(v, m):
        mf = m.astype(jnp.float32)
        cnt = jnp.sum(mf)
        mean = jnp.sum(v * mf) / jnp.maximum(cnt, 1.0)
        var = jnp.sum(((v - mean) ** 2) * mf) / jnp.maximum(cnt - 1.0, 1.0)
        std = jnp.where(cnt > 1, jnp.sqrt(var), 0.0)
        vmin = jnp.where(cnt > 0, jnp.min(jnp.where(m, v, jnp.inf)), 0.0)
        vmax = jnp.where(cnt > 0, jnp.max(jnp.where(m, v, -jnp.inf)), 0.0)
        mean = jnp.where(cnt > 0, mean, 0.0)
        return mean, std, vmin, vmax

    a_mean, a_std, a_min, a_max = masked_stats(x_lat, act)
    i_mean, i_std, i_min, i_max = masked_stats(x_lat, inact)

    stats = {
        "S2/avg_support_active": a_mean,
        "S2/std_support_active": a_std,
        "S2/min_support_active": a_min,
        "S2/max_support_active": a_max,
        "S2/avg_support_inactive": i_mean,
        "S2/std_support_inactive": i_std,
        "S2/min_support_inactive": i_min,
        "S2/max_support_inactive": i_max,
        "S2/norm_factor": jnp.mean(x_lat / (1e-10 + x_norm)),
    }
    return x_norm, x_bin, stats


# --------------------------- pure-JAX reference ------------------------------
def ref_deterministic(x, w_lateral):
    x_col = im2col_same(x, K)
    x_bin = (x_col > 0.5).astype(jnp.float32)
    x_lat = jnp.einsum("oc,bcs->bos", w_lateral, x_bin,
                       preferred_element_type=jnp.float32)
    x_norm = jnp.where(x_lat < MAX_SUPPORT, x_lat,
                       MAX_SUPPORT - 0.5 * (x_lat - MAX_SUPPORT))
    x_norm = x_norm / (1e-10 + jnp.max(x_norm, axis=-1, keepdims=True))
    x_norm = jnp.clip(x_norm, 0.0, 1.0)
    return (x_lat.reshape(x.shape[0], OUT_CHANNELS, H, W),
            x_norm.reshape(x.shape[0], OUT_CHANNELS, H, W))


# ----------------------------------- main ------------------------------------
if __name__ == "__main__":
    key = jax.random.PRNGKey(0)
    k_x, k_bern = jax.random.split(key)
    x = (jax.random.uniform(k_x, (B, IN_CHANNELS, H, W)) > 0.7).astype(jnp.float32)
    w_lateral = init_lateral_weights(IN_CHANNELS, OUT_CHANNELS, K, LOCALITY_SIZE)

    x_norm, x_bin, stats = lateral_forward(x, w_lateral, k_bern)
    jax.block_until_ready((x_norm, x_bin, stats["S2/norm_factor"]))

    # verify the deterministic part against a pure-JAX reference
    _, x_norm_ref = ref_deterministic(x, w_lateral)
    np.testing.assert_allclose(np.asarray(x_norm), np.asarray(x_norm_ref),
                               rtol=1e-4, atol=1e-5)
    assert x_norm.shape == (B, OUT_CHANNELS, H, W)
    assert x_bin.shape == (B, OUT_CHANNELS, H, W)
    assert set(np.unique(np.asarray(x_bin))).issubset({0.0, 1.0})

    print("KERNEL_OK")
</pallas_src>

<mosaic_0001>
module attributes {stable_mosaic.version = 11 : i64} {
  func.func @lateral_kernel(%arg0: i32, %arg1: memref<2x100xf32, #tpu.memory_space<vmem>>, %arg2: memref<100x512xbf16, #tpu.memory_space<vmem>>, %arg3: memref<2x512xf32, #tpu.memory_space<vmem>>, %arg4: memref<6x512xf32, #tpu.memory_space<vmem>>) attributes {dimension_semantics = [#tpu.dimension_semantics<arbitrary>], iteration_bounds = array<i64: 1>, scalar_prefetch = 0 : i64, scratch_operands = 0 : i64, tpu.core_type = #tpu.core_type<tc>, window_params = [{pipeline_mode = #tpu.pipeline_mode<synchronous>, transform_indices = @transform_0, window_bounds = array<i64: 2, 100>}, {pipeline_mode = #tpu.pipeline_mode<synchronous>, transform_indices = @transform_1, window_bounds = array<i64: 100, 512>}, {pipeline_mode = #tpu.pipeline_mode<synchronous>, transform_indices = @transform_2, window_bounds = array<i64: 2, 512>}, {pipeline_mode = #tpu.pipeline_mode<synchronous>, transform_indices = @transform_3, window_bounds = array<i64: 6, 512>}]} {
    %c0 = arith.constant 0 : index
    %c0_0 = arith.constant 0 : index
    %0 = vector.load %arg2[%c0, %c0_0] : memref<100x512xbf16, #tpu.memory_space<vmem>>, vector<100x512xbf16>
    %1 = arith.extf %0 : vector<100x512xbf16> to vector<100x512xf32>
    %c0_1 = arith.constant 0 : index
    %c0_2 = arith.constant 0 : index
    %2 = vector.load %arg1[%c0_1, %c0_2] : memref<2x100xf32, #tpu.memory_space<vmem>>, vector<2x100xf32>
    %cst = arith.constant dense<0.000000e+00> : vector<2x512xf32>
    %3 = tpu.matmul %2, %1, %cst {dimension_numbers = #tpu.dot_dimension_numbers<[1], [0], [0], [1], [0, 0, 1, 1], [], []>} : vector<2x100xf32>, vector<100x512xf32>, vector<2x512xf32> -> vector<2x512xf32>
    %cst_3 = arith.constant 6.500000e+00 : f32
    %4 = vector.broadcast %cst_3 : f32 to vector<2x512xf32>
    %5 = arith.cmpf olt, %3, %4 : vector<2x512xf32>
    %cst_4 = arith.constant 6.500000e+00 : f32
    %6 = vector.broadcast %cst_4 : f32 to vector<2x512xf32>
    %7 = arith.subf %3, %6 : vector<2x512xf32>
    %cst_5 = arith.constant 5.000000e-01 : f32
    %8 = vector.broadcast %cst_5 : f32 to vector<2x512xf32>
    %9 = arith.mulf %8, %7 : vector<2x512xf32>
    %cst_6 = arith.constant 6.500000e+00 : f32
    %10 = vector.broadcast %cst_6 : f32 to vector<2x512xf32>
    %11 = arith.subf %10, %9 : vector<2x512xf32>
    %12 = arith.select %5, %3, %11 : vector<2x512xi1>, vector<2x512xf32>
    %13 = vector.extract_strided_slice %12 {offsets = [0, 0], sizes = [2, 256], strides = [1, 1]} : vector<2x512xf32> to vector<2x256xf32>
    %cst_7 = arith.constant dense<0xFF800000> : vector<2xf32>
    %14 = vector.multi_reduction <maximumf>, %13, %cst_7 [1] : vector<2x256xf32> to vector<2xf32>
    %15 = vector.shape_cast %14 : vector<2xf32> to vector<2x1xf32>
    %cst_8 = arith.constant 1.000000e-10 : f32
    %16 = vector.broadcast %cst_8 : f32 to vector<2x1xf32>
    %17 = arith.addf %16, %15 : vector<2x1xf32>
    %18 = vector.broadcast %17 : vector<2x1xf32> to vector<2x256xf32>
    %19 = arith.divf %13, %18 : vector<2x256xf32>
    %20 = vector.extract_strided_slice %12 {offsets = [0, 256], sizes = [2, 256], strides = [1, 1]} : vector<2x512xf32> to vector<2x256xf32>
    %cst_9 = arith.constant dense<0xFF800000> : vector<2xf32>
    %21 = vector.multi_reduction <maximumf>, %20, %cst_9 [1] : vector<2x256xf32> to vector<2xf32>
    %22 = vector.shape_cast %21 : vector<2xf32> to vector<2x1xf32>
    %cst_10 = arith.constant 1.000000e-10 : f32
    %23 = vector.broadcast %cst_10 : f32 to vector<2x1xf32>
    %24 = arith.addf %23, %22 : vector<2x1xf32>
    %25 = vector.broadcast %24 : vector<2x1xf32> to vector<2x256xf32>
    %26 = arith.divf %20, %25 : vector<2x256xf32>
    %27 = tpu.concatenate %19, %26 in 1 : vector<2x256xf32>, vector<2x256xf32> -> vector<2x512xf32>
    %cst_11 = arith.constant 0.000000e+00 : f32
    %cst_12 = arith.constant 1.000000e+00 : f32
    %28 = vector.broadcast %cst_11 : f32 to vector<2x512xf32>
    %29 = arith.maximumf %28, %27 : vector<2x512xf32>
    %30 = vector.broadcast %cst_12 : f32 to vector<2x512xf32>
    %31 = arith.minimumf %30, %29 : vector<2x512xf32>
    %cst_13 = arith.constant 1.200000e+00 : f32
    %32 = vector.broadcast %cst_13 : f32 to vector<2x512xf32>
    %33 = math.powf %31, %32 : vector<2x512xf32>
    %cst_14 = arith.constant 0.000000e+00 : f32
    %cst_15 = arith.constant 1.000000e+00 : f32
    %34 = vector.broadcast %cst_14 : f32 to vector<2x512xf32>
    %35 = arith.maximumf %34, %33 : vector<2x512xf32>
    %36 = vector.broadcast %cst_15 : f32 to vector<2x512xf32>
    %37 = arith.minimumf %36, %35 : vector<2x512xf32>
    %c0_16 = arith.constant 0 : index
    %c0_17 = arith.constant 0 : index
    %38 = vector.load %arg3[%c0_16, %c0_17] : memref<2x512xf32, #tpu.memory_space<vmem>>, vector<2x512xf32>
    %39 = arith.cmpf olt, %38, %37 : vector<2x512xf32>
    %cst_18 = arith.constant 1.000000e+00 : f32
    %cst_19 = arith.constant 0.000000e+00 : f32
    %40 = vector.broadcast %cst_18 : f32 to vector<2x512xf32>
    %41 = vector.broadcast %cst_19 : f32 to vector<2x512xf32>
    %42 = arith.select %39, %40, %41 : vector<2x512xi1>, vector<2x512xf32>
    %43 = tpu.concatenate %3, %31, %42 in 0 : vector<2x512xf32>, vector<2x512xf32>, vector<2x512xf32> -> vector<6x512xf32>
    %c0_20 = arith.constant 0 : index
    %c0_21 = arith.constant 0 : index
    %44 = vector.load %arg4[%c0_20, %c0_21] : memref<6x512xf32, #tpu.memory_space<vmem>>, vector<6x512xf32>
    tpu.vector_store %arg4[%c0_20, %c0_21], %43 {strides = array<i32>} : memref<6x512xf32, #tpu.memory_space<vmem>>, vector<6x512xf32>,
    return
  }
  func.func @transform_0(%arg0: i32) -> (i32, i32) {
    %c0_i32 = arith.constant 0 : i32
    %c0_i32_0 = arith.constant 0 : i32
    %c0_i32_1 = arith.constant 0 : i32
    return %c0_i32, %c0_i32_0 : i32, i32
  }
  func.func @transform_1(%arg0: i32) -> (i32, i32) {
    %c0_i32 = arith.constant 0 : i32
    %c0_i32_0 = arith.constant 0 : i32
    %c0_i32_1 = arith.constant 0 : i32
    return %c0_i32, %c0_i32_0 : i32, i32
  }
  func.func @transform_2(%arg0: i32) -> (i32, i32) {
    %c0_i32 = arith.constant 0 : i32
    %c0_i32_0 = arith.constant 0 : i32
    %c0_i32_1 = arith.constant 0 : i32
    return %c0_i32, %c0_i32_0 : i32, i32
  }
  func.func @transform_3(%arg0: i32) -> (i32, i32) {
    %c0_i32 = arith.constant 0 : i32
    %c0_i32_0 = arith.constant 0 : i32
    %c0_i32_1 = arith.constant 0 : i32
    return %c0_i32, %c0_i32_0 : i32, i32
  }
}

</mosaic_0001>

<llo_original>
// kernel: tpu_custom_call.1
$region0: #{tpu_custom_call.1}
  #allocation0 [shape = 'u32[]', space=smem, size = 0x4, offset = 0x4, fixed_abs, tag = 'smem constant byte address 0x4 - core index']
  #allocation1 [shape = 'u32[144,128]{1,0:T(1,128)}', space=vmem, size = 0x12000, scoped, tag = 'internal scratch']
  %s0 = inlined_call_operand.hbm [shape: f32[2,100], index: 0, kind: input, shape index: {}]
  %s1 = inlined_call_operand.hbm [shape: bf16[100,512], index: 1, kind: input, shape index: {}]
  %s2 = inlined_call_operand.hbm [shape: f32[2,512], index: 2, kind: input, shape index: {}]
  %s3 = inlined_call_operand.hbm [shape: f32[6,512], index: 3, kind: output, shape index: {}]
  %s4 = sld [smem:[#allocation0]]
  $region34: #{tpu_custom_call.1} parent=0
    _
  %s6 = ssub.s32 1, %s4
  %s7 = scalar_select 0, %s6, %s4
  $region1: #{tpu_custom_call.1} parent=0
    #allocation2 [shape = 'u8[1024]{0}', space=vmem, size = 0x400, scoped, tag = 'input window, operand 0, single buffered']
    #allocation3 [shape = 's32[1]{0}', space=sflag, size = 0x4, scoped, tag = 'scoped memory for tpu_custom_call.1']
    #allocation4 [shape = 's32[1]{0}', space=sflag, size = 0x4, scoped, tag = 'scoped memory for tpu_custom_call.1']
    #allocation5 [shape = 'u8[106496]{0}', space=vmem, size = 0x1a000, scoped, tag = 'input window, operand 1, single buffered']
    #allocation6 [shape = 's32[1]{0}', space=sflag, size = 0x4, scoped, tag = 'scoped memory for tpu_custom_call.1']
    #allocation7 [shape = 'u8[4096]{0}', space=vmem, size = 0x1000, scoped, tag = 'input window, operand 2, single buffered']
    #allocation8 [shape = 'u8[16384]{0}', space=vmem, size = 0x4000, scoped, tag = 'output window, operand 0, single buffered']
    %8 = vsyncpa [#allocation3], 0
    %9 = vsyncpa [#allocation6], 0
    %10 = vsyncpa [#allocation4], 0
    // Predicated region
    $region2: #{tpu_custom_call.1} parent=1 // pred_check
      _
    $region3: #{tpu_custom_call.1} parent=1 // pred_check_branch
      %12 = sbr.rel (0) target = $region5
    $region4: #{tpu_custom_call.1} parent=1 // pred_region
      %s14 = ssub.s32 32, 32
      %15 = vsyncadd [#allocation3], %s14
      %s17 = sshll.u32 [#allocation2], 4
      %s18 = int_to_ptr.vmem [resolvable:$true] %s17
      %20 = dma.hbm_to_vmem [thread:$0]  %s0, 32, %s18, [#allocation3]
    $region5: #{tpu_custom_call.1} parent=1 // pred_fallthru
      _
    // Predicated region
    $region6: #{tpu_custom_call.1} parent=1 // pred_check
      _
    $region7: #{tpu_custom_call.1} parent=1 // pred_check_branch
      %22 = sbr.rel (0) target = $region9
    $region8: #{tpu_custom_call.1} parent=1 // pred_region
      %s24 = ssub.s32 3328, 3328
      %25 = vsyncadd [#allocation6], %s24
      %s26 = sshll.u32 [#allocation5], 4
      %s27 = int_to_ptr.vmem [resolvable:$true] %s26
      %32 = dma.hbm_to_vmem [thread:$0]  %s1, 3328, %s27, [#allocation6], 256, 256, 16
    $region9: #{tpu_custom_call.1} parent=1 // pred_fallthru
      _
    // Predicated region
    $region10: #{tpu_custom_call.1} parent=1 // pred_check
      _
    $region11: #{tpu_custom_call.1} parent=1 // pred_check_branch
      %34 = sbr.rel (0) target = $region13
    $region12: #{tpu_custom_call.1} parent=1 // pred_region
      %s36 = ssub.s32 128, 128
      %37 = vsyncadd [#allocation6], %s36
      %s39 = sshll.u32 [#allocation7], 4
      %s40 = int_to_ptr.vmem [resolvable:$true] %s39
      %42 = dma.hbm_to_vmem [thread:$0]  %s2, 128, %s40, [#allocation6]
    $region13: #{tpu_custom_call.1} parent=1 // pred_fallthru
      _
    // Predicated region
    $region14: #{tpu_custom_call.1} parent=1 // pred_check
      _
    $region15: #{tpu_custom_call.1} parent=1 // pred_check_branch
      %44 = sbr.rel (0) target = $region17
    $region16: #{tpu_custom_call.1} parent=1 // pred_region
      %45 = dma.done [#allocation3], 32
    $region17: #{tpu_custom_call.1} parent=1 // pred_fallthru
      _
    // Predicated region
    $region18: #{tpu_custom_call.1} parent=1 // pred_check
      _
    $region19: #{tpu_custom_call.1} parent=1 // pred_check_branch
      %47 = sbr.rel (0) target = $region21
    $region20: #{tpu_custom_call.1} parent=1 // pred_region
      %48 = dma.done [#allocation6], 3328
    $region21: #{tpu_custom_call.1} parent=1 // pred_fallthru
      _
    // Predicated region
    $region22: #{tpu_custom_call.1} parent=1 // pred_check
      _
    $region23: #{tpu_custom_call.1} parent=1 // pred_check_branch
      %50 = sbr.rel (0) target = $region25
    $region24: #{tpu_custom_call.1} parent=1 // pred_region
      %51 = dma.done [#allocation6], 128
    $region25: #{tpu_custom_call.1} parent=1 // pred_fallthru
      _
    %v52 = vld [vmem:[#allocation5] sm:$0xff]
    %v53 = vld [vmem:[#allocation5 + $0x8] sm:$0xff]
    %v54 = vld [vmem:[#allocation5 + $0x10] sm:$0xff]
    %v55 = vld [vmem:[#allocation5 + $0x18] sm:$0xff]
    %v56 = vld [vmem:[#allocation5 + $0x20] sm:$0xff]
    %v57 = vld [vmem:[#allocation5 + $0x28] sm:$0xff]
    %v58 = vld [vmem:[#allocation5 + $0x30] sm:$0xff]
    %v59 = vld [vmem:[#allocation5 + $0x38] sm:$0xff]
    %v60 = vld [vmem:[#allocation5 + $0x40] sm:$0xff]
    %v61 = vld [vmem:[#allocation5 + $0x48] sm:$0xff]
    %v62 = vld [vmem:[#allocation5 + $0x50] sm:$0xff]
    %v63 = vld [vmem:[#allocation5 + $0x58] sm:$0xff]
    %v64 = vld [vmem:[#allocation5 + $0x60] sm:$0xff]
    %v65 = vld [vmem:[#allocation5 + $0x68] sm:$0xff]
    %v66 = vld [vmem:[#allocation5 + $0x70] sm:$0xff]
    %v67 = vld [vmem:[#allocation5 + $0x78] sm:$0xff]
    %v68 = vld [vmem:[#allocation5 + $0x80] sm:$0xff]
    %v69 = vld [vmem:[#allocation5 + $0x88] sm:$0xff]
    %v70 = vld [vmem:[#allocation5 + $0x90] sm:$0xff]
    %v71 = vld [vmem:[#allocation5 + $0x98] sm:$0xff]
    %v72 = vld [vmem:[#allocation5 + $0xa0] sm:$0xff]
    %v73 = vld [vmem:[#allocation5 + $0xa8] sm:$0xff]
    %v74 = vld [vmem:[#allocation5 + $0xb0] sm:$0xff]
    %v75 = vld [vmem:[#allocation5 + $0xb8] sm:$0xff]
    %v76 = vld [vmem:[#allocation5 + $0xc0] sm:$0x33]
    %v77 = vld [vmem:[#allocation5 + $0xc8] sm:$0x33]
    %v78 = vunpack.c.l.bf16 %v52
    %v79 = vunpack.c.h.bf16 %v52
    %v80 = vunpack.c.l.bf16 %v53
    %v81 = vunpack.c.h.bf16 %v53
    %v82 = vunpack.c.l.bf16 %v54
    %v83 = vunpack.c.h.bf16 %v54
    %v84 = vunpack.c.l.bf16 %v55
    %v85 = vunpack.c.h.bf16 %v55
    %v86 = vunpack.c.l.bf16 %v56
    %v87 = vunpack.c.h.bf16 %v56
    %v88 = vunpack.c.l.bf16 %v57
    %v89 = vunpack.c.h.bf16 %v57
    %v90 = vunpack.c.l.bf16 %v58
    %v91 = vunpack.c.h.bf16 %v58
    %v92 = vunpack.c.l.bf16 %v59
    %v93 = vunpack.c.h.bf16 %v59
    %v94 = vunpack.c.l.bf16 %v60
    %v95 = vunpack.c.h.bf16 %v60
    %v96 = vunpack.c.l.bf16 %v61
    %v97 = vunpack.c.h.bf16 %v61
    %v98 = vunpack.c.l.bf16 %v62
    %v99 = vunpack.c.h.bf16 %v62
    %v100 = vunpack.c.l.bf16 %v63
    %v101 = vunpack.c.h.bf16 %v63
    %v102 = vunpack.c.l.bf16 %v64
    %v103 = vunpack.c.h.bf16 %v64
    %v104 = vunpack.c.l.bf16 %v65
    %v105 = vunpack.c.h.bf16 %v65
    %v106 = vunpack.c.l.bf16 %v66
    %v107 = vunpack.c.h.bf16 %v66
    %v108 = vunpack.c.l.bf16 %v67
    %v109 = vunpack.c.h.bf16 %v67
    %v110 = vunpack.c.l.bf16 %v68
    %v111 = vunpack.c.h.bf16 %v68
    %v112 = vunpack.c.l.bf16 %v69
    %v113 = vunpack.c.h.bf16 %v69
    %v114 = vunpack.c.l.bf16 %v70
    %v115 = vunpack.c.h.bf16 %v70
    %v116 = vunpack.c.l.bf16 %v71
    %v117 = vunpack.c.h.bf16 %v71
    %v118 = vunpack.c.l.bf16 %v72
    %v119 = vunpack.c.h.bf16 %v72
    %v120 = vunpack.c.l.bf16 %v73
    %v121 = vunpack.c.h.bf16 %v73
    %v122 = vunpack.c.l.bf16 %v74
    %v123 = vunpack.c.h.bf16 %v74
    %v124 = vunpack.c.l.bf16 %v75
    %v125 = vunpack.c.h.bf16 %v75
    %v126 = vunpack.c.l.bf16 %v76
    %v127 = vunpack.c.h.bf16 %v76
    %v128 = vunpack.c.l.bf16 %v77
    %v129 = vunpack.c.h.bf16 %v77
    %v130 = vld [vmem:[#allocation2] sm:$0x3]
    %vm131 = vcmask 818176
    %v133 = vsel %vm131, %v130, 0
    %vm135 = vcmask 1043456
    %v137 = vsel %vm135, %v126, 0
    %v140 = vsel %vm135, %v127, 0
    %v143 = vsel %vm135, %v128, 0
    %v146 = vsel %vm135, %v129, 0
    %148 = vmatprep.subr.mxu0 0.0
    %149 = vmatpush1.msra.mxu0 0.0
    %150 = vmatprep.subr.mxu0 0.0
    %151 = vmatpush1.msra.mxu0 0.0
    %152 = vmatprep.subr.mxu0 0.0
    %153 = vmatpush1.msra.mxu0 0.0
    %154 = vmatprep.subr.mxu0 %v140
    %155 = vmatpush1.msra.mxu0 %v137
    %156 = vmatprep.subr.mxu0 %v123
    %157 = vmatpush1.msra.mxu0 %v122
    %158 = vmatprep.subr.mxu0 %v119
    %159 = vmatpush1.msra.mxu0 %v118
    %160 = vmatprep.subr.mxu0 %v115
    %161 = vmatpush1.msra.mxu0 %v114
    %162 = vmatprep.subr.mxu0 %v111
    %163 = vmatpush1.msra.mxu0 %v110
    %164 = vmatprep.subr.mxu0 %v107
    %165 = vmatpush1.msra.mxu0 %v106
    %166 = vmatprep.subr.mxu0 %v103
    %167 = vmatpush1.msra.mxu0 %v102
    %168 = vmatprep.subr.mxu0 %v99
    %169 = vmatpush1.msra.mxu0 %v98
    %170 = vmatprep.subr.mxu0 %v95
    %171 = vmatpush1.msra.mxu0 %v94
    %172 = vmatprep.subr.mxu0 %v91
    %173 = vmatpush1.msra.mxu0 %v90
    %174 = vmatprep.subr.mxu0 %v87
    %175 = vmatpush1.msra.mxu0 %v86
    %176 = vmatprep.subr.mxu0 %v83
    %177 = vmatpush1.msra.mxu0 %v82
    %178 = vmatprep.subr.mxu0 %v79
    %179 = vmatpush1.msra.mxu0 %v78
    %180 = vmatprep.subr.mxu0 0.0
    %181 = vmatpush2.msra.mxu0 0.0
    %182 = vmatprep.subr.mxu0 0.0
    %183 = vmatpush2.msra.mxu0 0.0
    %184 = vmatprep.subr.mxu0 0.0
    %185 = vmatpush2.msra.mxu0 0.0
    %186 = vmatprep.subr.mxu0 0.0
    %187 = vmatpush2.msra.mxu0 0.0
    %188 = vmatprep.subr.mxu0 0.0
    %189 = vmatpush2.msra.mxu0 0.0
    %190 = vmatprep.subr.mxu0 0.0
    %191 = vmatpush2.msra.mxu0 0.0
    %192 = vmatprep.subr.mxu0 0.0
    %193 = vmatpush2.msra.mxu0 0.0
    %194 = vmatprep.subr.mxu0 0.0
    %195 = vmatpush2.msra.mxu0 0.0
    %196 = vmatprep.subr.mxu0 0.0
    %197 = vmatpush2.msra.mxu0 0.0
    %198 = vmatprep.subr.mxu0 0.0
    %199 = vmatpush2.msra.mxu0 0.0
    %200 = vmatprep.subr.mxu0 0.0
    %201 = vmatpush2.msra.mxu0 0.0
    %202 = vmatprep.subr.mxu0 0.0
    %203 = vmatpush2.msra.mxu0 0.0
    %204 = vmatprep.subr.mxu0 0.0
    %205 = vmatpush2.msra.mxu0 0.0
    %206 = vmatprep.subr.mxu0 0.0
    %207 = vmatpush2.msra.mxu0 0.0
    %208 = vmatprep.subr.mxu0 0.0
    %209 = vmatpush2.msra.mxu0 0.0
    %210 = vmatprep.subr.mxu0 0.0
    %211 = vmatpush2.msra.mxu0 0.0
    %212 = vmatprep.mubr.f32.mxu0 0.0
    %213 = vmatmul.mubr.f32.gmra.mxu0 %v133
    %v214 = vpop.f32.mrf.mxu0
    %v215 = vadd.f32 0.0, %v214
    %v216 = vpop.f32.mrf.mxu0
    %v217 = vadd.f32 0.0, %v216
    %218 = vdwg.mxu0
    %219 = vmatprep.subr.mxu0 0.0
    %220 = vmatpush1.msra.mxu0 0.0
    %221 = vmatprep.subr.mxu0 0.0
    %222 = vmatpush1.msra.mxu0 0.0
    %223 = vmatprep.subr.mxu0 0.0
    %224 = vmatpush1.msra.mxu0 0.0
    %225 = vmatprep.subr.mxu0 %v146
    %226 = vmatpush1.msra.mxu0 %v143
    %227 = vmatprep.subr.mxu0 %v125
    %228 = vmatpush1.msra.mxu0 %v124
    %229 = vmatprep.subr.mxu0 %v121
    %230 = vmatpush1.msra.mxu0 %v120
    %231 = vmatprep.subr.mxu0 %v117
    %232 = vmatpush1.msra.mxu0 %v116
    %233 = vmatprep.subr.mxu0 %v113
    %234 = vmatpush1.msra.mxu0 %v112
    %235 = vmatprep.subr.mxu0 %v109
    %236 = vmatpush1.msra.mxu0 %v108
    %237 = vmatprep.subr.mxu0 %v105
    %238 = vmatpush1.msra.mxu0 %v104
    %239 = vmatprep.subr.mxu0 %v101
    %240 = vmatpush1.msra.mxu0 %v100
    %241 = vmatprep.subr.mxu0 %v97
    %242 = vmatpush1.msra.mxu0 %v96
    %243 = vmatprep.subr.mxu0 %v93
    %244 = vmatpush1.msra.mxu0 %v92
    %245 = vmatprep.subr.mxu0 %v89
    %246 = vmatpush1.msra.mxu0 %v88
    %247 = vmatprep.subr.mxu0 %v85
    %248 = vmatpush1.msra.mxu0 %v84
    %249 = vmatprep.subr.mxu0 %v81
    %250 = vmatpush1.msra.mxu0 %v80
    %251 = vmatprep.subr.mxu0 0.0
    %252 = vmatpush2.msra.mxu0 0.0
    %253 = vmatprep.subr.mxu0 0.0
    %254 = vmatpush2.msra.mxu0 0.0
    %255 = vmatprep.subr.mxu0 0.0
    %256 = vmatpush2.msra.mxu0 0.0
    %257 = vmatprep.subr.mxu0 0.0
    %258 = vmatpush2.msra.mxu0 0.0
    %259 = vmatprep.subr.mxu0 0.0
    %260 = vmatpush2.msra.mxu0 0.0
    %261 = vmatprep.subr.mxu0 0.0
    %262 = vmatpush2.msra.mxu0 0.0
    %263 = vmatprep.subr.mxu0 0.0
    %264 = vmatpush2.msra.mxu0 0.0
    %265 = vmatprep.subr.mxu0 0.0
    %266 = vmatpush2.msra.mxu0 0.0
    %267 = vmatprep.subr.mxu0 0.0
    %268 = vmatpush2.msra.mxu0 0.0
    %269 = vmatprep.subr.mxu0 0.0
    %270 = vmatpush2.msra.mxu0 0.0
    %271 = vmatprep.subr.mxu0 0.0
    %272 = vmatpush2.msra.mxu0 0.0
    %273 = vmatprep.subr.mxu0 0.0
    %274 = vmatpush2.msra.mxu0 0.0
    %275 = vmatprep.subr.mxu0 0.0
    %276 = vmatpush2.msra.mxu0 0.0
    %277 = vmatprep.subr.mxu0 0.0
    %278 = vmatpush2.msra.mxu0 0.0
    %279 = vmatprep.subr.mxu0 0.0
    %280 = vmatpush2.msra.mxu0 0.0
    %281 = vmatprep.subr.mxu0 0.0
    %282 = vmatpush2.msra.mxu0 0.0
    %283 = vmatprep.mubr.f32.mxu0 0.0
    %284 = vmatmul.mubr.f32.gmra.mxu0 %v133
    %v285 = vpop.f32.mrf.mxu0
    %v286 = vadd.f32 0.0, %v285
    %v287 = vpop.f32.mrf.mxu0
    %v288 = vadd.f32 0.0, %v287
    %289 = vdwg.mxu0
    %vm290 = vcmp.lt.f32.partialorder %v215, 6.5
    %vm291 = vcmp.lt.f32.partialorder %v217, 6.5
    %vm292 = vcmp.lt.f32.partialorder %v286, 6.5
    %vm293 = vcmp.lt.f32.partialorder %v288, 6.5
    %v294 = vsub.f32 %v215, 6.5
    %v295 = vsub.f32 %v217, 6.5
    %v296 = vsub.f32 %v286, 6.5
    %v297 = vsub.f32 %v288, 6.5
    %v298 = vmul.f32 %v294, 0.5
    %v299 = vmul.f32 %v295, 0.5
    %v300 = vmul.f32 %v296, 0.5
    %v301 = vmul.f32 %v297, 0.5
    %v302 = vsub.f32 6.5, %v298
    %v303 = vsub.f32 6.5, %v299
    %v304 = vsub.f32 6.5, %v300
    %v305 = vsub.f32 6.5, %v301
    %v306 = vsel %vm290, %v215, %v302
    %v307 = vsel %vm291, %v217, %v303
    %v308 = vsel %vm292, %v286, %v304
    %v309 = vsel %vm293, %v288, %v305
    %vm310 = vcmask 1041408
    %v311 = vsel %vm310, %v306, -inf
    %v312 = vsel %vm310, %v307, -inf
    %v313 = vmax.f32 %v311, %v312
    %314 = vmax.xlane.f32.xlu0 %v313
    %v315 = vpop.xlane.xlu0 %314
    %v316 = vadd.f32 %v315, 1e-10
    %v317 = vrcp.pop %v316
    %v318 = vmul.f32 %v306, %v317
    %v319 = vmul.f32 %v307, %v317
    %v320 = vsel %vm310, %v308, -inf
    %v321 = vsel %vm310, %v309, -inf
    %v322 = vmax.f32 %v320, %v321
    %323 = vmax.xlane.f32.xlu0 %v322
    %v324 = vpop.xlane.xlu0 %323
    %v325 = vadd.f32 %v324, 1e-10
    %v326 = vrcp.pop %v325
    %v327 = vmul.f32 %v308, %v326
    %v328 = vmul.f32 %v309, %v326
    %v329 = vmax.f32 %v318, 0.0
    %v330 = vmax.f32 %v319, 0.0
    %v331 = vmax.f32 %v327, 0.0
    %v332 = vmax.f32 %v328, 0.0
    %v333 = vmin.f32 %v329, 1.0
    %v334 = vmin.f32 %v330, 1.0
    %v335 = vmin.f32 %v331, 1.0
    %v336 = vmin.f32 %v332, 1.0
    %v337 = vpow.f32 %v333, 1.2
    %v338 = vpow.f32 %v334, 1.2
    %v339 = vpow.f32 %v335, 1.2
    %v340 = vpow.f32 %v336, 1.2
    %v341 = vmax.f32 %v337, 0.0
    %v342 = vmax.f32 %v338, 0.0
    %v343 = vmax.f32 %v339, 0.0
    %v344 = vmax.f32 %v340, 0.0
    %v345 = vmin.f32 %v341, 1.0
    %v346 = vmin.f32 %v342, 1.0
    %v347 = vmin.f32 %v343, 1.0
    %v348 = vmin.f32 %v344, 1.0
    %v349 = vld [vmem:[#allocation7] sm:$0xff]
    %v354 = vcombine.low %v345, %v346
    %v355 = vcombine.low %v347, %v348
    %v357 = vunpack.c.l.s4 1983009808
    %v358 = vunpack.c.0.s8 %v357
    %v359 = vlaneseq
    %v360 = vshrl.u32 %v359, 7
    %v361 = vsub.s32 %v358, %v360
    %v362 = vrot.slane %v354, %v361
    %v364 = vunpack.c.l.s4 1983009808
    %v365 = vunpack.c.0.s8 %v364
    %v366 = vlaneseq
    %v367 = vshrl.u32 %v366, 7
    %v368 = vsub.s32 %v365, %v367
    %v369 = vrot.slane %v355, %v368
    %v370 = vcombine.low %v362, %v369
    %vm372 = vcmp.lt.f32.partialorder %v349, %v370
    %v373 = vsel %vm372, 1.0, 0.0
    %v378 = vrot.slane %v333, 6
    %v379 = vrot.slane %v334, 6
    %v380 = vrot.slane %v335, 6
    %v381 = vrot.slane %v336, 6
    %v387 = vcombine.high %v373, %v373
    %v389 = vunpack.c.l.s4 1983009808
    %v390 = vunpack.c.0.s8 %v389
    %v391 = vlaneseq
    %v392 = vshrl.u32 %v391, 7
    %v393 = vsub.s32 %v390, %v392
    %v394 = vrot.slane %v373, %v393
    %v396 = vunpack.c.l.s4 1983009808
    %v397 = vunpack.c.0.s8 %v396
    %v398 = vlaneseq
    %v399 = vshrl.u32 %v398, 7
    %v400 = vsub.s32 %v397, %v399
    %v401 = vrot.slane %v387, %v400
    %v402 = vcombine.low %v394, %v394
    %v403 = vcombine.low %v401, %v401
    %v408 = vsel %vm310, %v215, %v378
    %v409 = vsel %vm310, %v217, %v379
    %v410 = vsel %vm310, %v286, %v380
    %v411 = vsel %vm310, %v288, %v381
    %v412 = vsel %vm135, %v408, %v402
    %v413 = vsel %vm135, %v409, %v394
    %v414 = vsel %vm135, %v410, %v403
    %v415 = vsel %vm135, %v411, %v401
    %416 = vst [vmem:[#allocation8] sm:$0x3f] %v412
    %417 = vst [vmem:[#allocation8 + $0x8] sm:$0x3f] %v413
    %418 = vst [vmem:[#allocation8 + $0x10] sm:$0x3f] %v414
    %419 = vst [vmem:[#allocation8 + $0x18] sm:$0x3f] %v415
    // Predicated region
    $region26: #{tpu_custom_call.1} parent=1 // pred_check
      _
    $region27: #{tpu_custom_call.1} parent=1 // pred_check_branch
      %421 = sbr.rel (0) target = $region29
    $region28: #{tpu_custom_call.1} parent=1 // pred_region
      %s423 = ssub.s32 512, 512
      %424 = vsyncadd [#allocation4], %s423
      %s426 = sshll.u32 [#allocation8], 4
      %s427 = int_to_ptr.vmem [resolvable:$true] %s426
      %429 = dma.vmem_to_hbm [thread:$0]  %s427, 512, %s3, [#allocation4]
    $region29: #{tpu_custom_call.1} parent=1 // pred_fallthru
      _
    // Predicated region
    $region30: #{tpu_custom_call.1} parent=1 // pred_check
      _
    $region31: #{tpu_custom_call.1} parent=1 // pred_check_branch
      %431 = sbr.rel (0) target = $region33
    $region32: #{tpu_custom_call.1} parent=1 // pred_region
      %432 = dma.done [#allocation4], 512
    $region33: #{tpu_custom_call.1} parent=1 // pred_fallthru
      _
    %433 = vsyncpa [#allocation3], 1
    %434 = vsyncpa [#allocation6], 1
    %435 = vsyncpa [#allocation4], 1

</llo_original>
